<compile_context>
chip_gen: v7x
topology: tpu7x:2x2x1
jax: 0.10.0
libtpu: 0.0.40
codegen_flags: <defaults>
</compile_context>

<pallas_src>
import numpy as np
import jax
import jax.numpy as jnp
from jax.experimental import pallas as pl
from jax.experimental.pallas import tpu as pltpu

_LANE = 128
_SUBLANE = 8


def _round_up(n, m):
    return (n + m - 1) // m * m


def vqvae_kernel(x_ref, w1_ref, b1_ref, w2_ref, b2_ref,
                 emb_ref, embt_ref, esq_ref,
                 w3_ref, b3_ref, w4s_ref, b4s_ref,
                 sz_ref, sq_ref, imask_ref,
                 out_ref):
    f32 = jnp.float32
    x = x_ref[...]

    # ---- encoder: Linear -> ReLU -> Linear (all f32) ----
    h1 = jnp.maximum(
        jnp.dot(x, w1_ref[...], preferred_element_type=f32) + b1_ref[...], 0.0)
    z = jnp.dot(h1, w2_ref[...], preferred_element_type=f32) + b2_ref[...]   # [Bt, D]

    # ---- vector quantization ----
    e = emb_ref[...]                                         # [K, D]
    K = e.shape[0]
    z_sq = jnp.sum(z * z, axis=1, keepdims=True)             # [Bt, 1]
    cross = jnp.dot(z, embt_ref[...],                        # pre-transposed E^T
                    preferred_element_type=f32)              # [Bt, K]
    d = z_sq + esq_ref[...] - 2.0 * cross                    # [Bt, K]

    # first-occurrence argmin (matches torch .min(-1))
    min_d = jnp.min(d, axis=-1, keepdims=True)
    col = jax.lax.broadcasted_iota(jnp.int32, d.shape, 1)
    idx = jnp.min(jnp.where(d == min_d, col, K), axis=-1, keepdims=True)     # [Bt,1]

    # codebook gather via one-hot matmul
    onehot = (col == idx).astype(f32)                        # [Bt, K]
    zq_emb = jnp.dot(onehot, e, preferred_element_type=f32)  # [Bt, D]

    # straight-through arithmetic exactly as written in the module
    zq = zq_emb + (z - zq_emb)

    # ---- decoder: Linear -> ReLU -> Linear ----
    # The last layer's weights/bias were pre-placed into the padded output slab
    # in the wrapper (w4s = w4 @ sx, b4s = b4 @ sx), so this matmul directly
    # produces x_recon at its column offset in the lane-dense [Bt, Wp] output.
    h2 = jnp.maximum(
        jnp.dot(zq, w3_ref[...], preferred_element_type=f32) + b3_ref[...], 0.0)
    packed = jnp.dot(h2, w4s_ref[...], preferred_element_type=f32) + b4s_ref[...]

    # place z, z_q and idx (as f32) into the same slab; single full-width store
    packed += jnp.dot(z, sz_ref[...], preferred_element_type=f32)
    packed += jnp.dot(zq, sq_ref[...], preferred_element_type=f32)
    packed += idx.astype(f32) * imask_ref[...]
    out_ref[...] = packed


def _make_placement(rows, total, offset):
    """0/1 selector placing a [*, rows] block at columns [offset, offset+rows)."""
    s = np.zeros((rows, total), np.float32)
    s[np.arange(rows), offset + np.arange(rows)] = 1.0
    return jnp.asarray(s)


def _vmem_capacity_bytes():
    try:
        return int(pltpu.get_tpu_info().vmem_capacity_bytes)
    except Exception:
        return 128 << 20   # v5e/v6e physical VMEM


def vqvae_forward(x, params, *, block_b=2048):
    """Fused VQVAE forward. Returns (x_recon, z, z_q, indices[int32])."""
    w1, b1, w2, b2, emb, w3, b3, w4, b4 = params
    B, input_dim = x.shape
    K, D = emb.shape
    hidden = w1.shape[1]
    assert K < (1 << 24), "idx is round-tripped through f32; requires K < 2^24"

    W = input_dim + 2 * D + 1                 # logical packed width
    Wp = _round_up(W, _LANE)                  # lane-dense (unmasked vst) width
    idx_col = input_dim + 2 * D

    # --- batch tiling: big tiles, no wrapper-side pad/copy of x ---
    Bt = _round_up(max(min(block_b, B), 1), _SUBLANE)
    # keep >= 2 grid steps when possible so v7x's two TensorCores both get work
    if B > _SUBLANE and pl.cdiv(B, Bt) < 2:
        Bt = _round_up(pl.cdiv(B, 2), _SUBLANE)
    num_tiles = pl.cdiv(B, Bt)                # last tile may be partial (OOB rows
                                              # are row-local garbage, never written)

    # --- codebook layout plumbing, done once in the wrapper ---
    emb_t = emb.T                                          # [D, K]
    e_sq = jnp.sum(emb * emb, axis=1)[None, :]             # [1, K]

    # --- placement selectors at the lane-dense width ---
    sx = _make_placement(input_dim, Wp, 0)
    sz = _make_placement(D, Wp, input_dim)
    sq = _make_placement(D, Wp, input_dim + D)
    imask = jnp.zeros((1, Wp), jnp.float32).at[0, idx_col].set(1.0)

    # fold x_recon placement into decoder's last layer (bit-exact: sx is a pure
    # column-placement matrix with one nonzero per column)
    w4s = jnp.dot(w4, sx)                                   # [hidden, Wp]
    b4s = jnp.dot(b4, sx)                                   # [1, Wp]

    consts = (w1, b1, w2, b2, emb, emb_t, e_sq, w3, b3, w4s, b4s, sz, sq, imask)

    def tile_spec(last):
        return pl.BlockSpec((Bt, last), lambda i: (i, 0))

    def resident_spec(a):
        # Constant index_map: DMA'd once, stays resident across batch tiles.
        # TODO(synk): for realistic (large) codebooks on v7x, add
        # pipeline_mode=pl.Buffered(1) here to drop the second pipeline buffer.
        return pl.BlockSpec(a.shape, lambda i: (0, 0))

    # --- lane/sublane-padding-aware VMEM estimate; raise the scoped limit only
    # when needed and cap it per-generation (<= ~75% of physical VMEM) ---
    def padded_bytes(shape):
        r, c = shape
        return _round_up(r, _SUBLANE) * _round_up(c, _LANE) * 4

    const_bytes = sum(padded_bytes(a.shape) for a in consts)      # x2 (default dbl-buf)
    act_bytes = 2 * Bt * (_round_up(input_dim, _LANE) + Wp) * 4   # dbl-buffered I/O tiles
    tmp_cols = (2 * _round_up(hidden, _LANE)            # h1, h2
                + 3 * _round_up(D, _LANE)               # z, zq_emb, zq
                + 3 * _round_up(K, _LANE)               # cross, d, onehot
                + Wp                                    # packed
                + 3 * _LANE)                            # z_sq, min_d, idx ([Bt,1] lane-padded)
    tmp_bytes = Bt * tmp_cols * 4
    est = 2 * const_bytes + act_bytes + tmp_bytes

    cp_kwargs = dict(dimension_semantics=("parallel",))
    if est > (16 << 20):                                   # above v5e default scoped VMEM
        cap = int(0.75 * _vmem_capacity_bytes())           # ~48 MiB on v7x, ~96 MiB v5e/v6e
        cp_kwargs["vmem_limit_bytes"] = int(min(est + (8 << 20), cap))

    packed = pl.pallas_call(
        vqvae_kernel,
        grid=(num_tiles,),
        in_specs=[tile_spec(input_dim)] + [resident_spec(a) for a in consts],
        out_specs=tile_spec(Wp),
        out_shape=jax.ShapeDtypeStruct((B, Wp), jnp.float32),
        compiler_params=pltpu.CompilerParams(**cp_kwargs),
    )(x, *consts)

    x_recon = packed[:, :input_dim]
    z = packed[:, input_dim:input_dim + D]
    z_q = packed[:, input_dim + D:input_dim + 2 * D]
    idx = packed[:, idx_col].astype(jnp.int32)              # exact: K < 2^24
    return x_recon, z, z_q, idx


def init_params(key, input_dim, hidden_dim, num_embeddings, embedding_dim):
    """Deterministic synthetic init mimicking PyTorch defaults (weights stored [in, out])."""
    ks = jax.random.split(key, 9)

    def linear(kw, kb, fan_in, fan_out):
        bound = 1.0 / np.sqrt(fan_in)
        w = jax.random.uniform(kw, (fan_in, fan_out), jnp.float32, -bound, bound)
        b = jax.random.uniform(kb, (1, fan_out), jnp.float32, -bound, bound)
        return w, b

    w1, b1 = linear(ks[0], ks[1], input_dim, hidden_dim)
    w2, b2 = linear(ks[2], ks[3], hidden_dim, embedding_dim)
    emb = jax.random.uniform(ks[4], (num_embeddings, embedding_dim), jnp.float32,
                             -1.0 / num_embeddings, 1.0 / num_embeddings)
    w3, b3 = linear(ks[5], ks[6], embedding_dim, hidden_dim)
    w4, b4 = linear(ks[7], ks[8], hidden_dim, input_dim)
    return (w1, b1, w2, b2, emb, w3, b3, w4, b4)


def vqvae_reference(x, params):
    """Plain-JAX full-f32-precision reference of the PyTorch forward."""
    w1, b1, w2, b2, emb, w3, b3, w4, b4 = params
    hp = jax.lax.Precision.HIGHEST
    h1 = jnp.maximum(jnp.dot(x, w1, precision=hp) + b1, 0.0)
    z = jnp.dot(h1, w2, precision=hp) + b2
    d = (jnp.sum(z ** 2, axis=1, keepdims=True) + jnp.sum(emb ** 2, axis=1)
         - 2.0 * jnp.dot(z, emb.T, precision=hp))
    idx = jnp.argmin(d, axis=-1)
    zq_emb = emb[idx]
    zq = zq_emb + (z - zq_emb)
    h2 = jnp.maximum(jnp.dot(zq, w3, precision=hp) + b3, 0.0)
    x_recon = jnp.dot(h2, w4, precision=hp) + b4
    return x_recon, z, zq, idx


def _check_against_reference(x, params, outs, atol=1e-5):
    x_recon, z, z_q, idx = (np.asarray(a) for a in outs)
    xr_r, z_r, zq_r, idx_r = (np.asarray(a) for a in vqvae_reference(x, params))
    assert np.allclose(x_recon, xr_r, atol=atol), "x_recon mismatch"
    assert np.allclose(z, z_r, atol=atol), "z mismatch"
    assert np.allclose(z_q, zq_r, atol=atol), "z_q mismatch"
    # Index check that tolerates exact numerical ties: every chosen code must
    # attain the minimum distance (float64 ground truth).
    assert idx.shape == idx_r.shape and idx.dtype == np.int32
    emb = np.asarray(params[4]).astype(np.float64)
    assert (idx >= 0).all() and (idx < emb.shape[0]).all()
    z64 = z_r.astype(np.float64)
    d = ((z64[:, None, :] - emb[None, :, :]) ** 2).sum(-1)
    chosen = d[np.arange(d.shape[0]), idx]
    assert np.allclose(chosen, d.min(axis=-1), atol=1e-4, rtol=1e-4), "indices not minimal"


if __name__ == "__main__":
    # Small shapes consistent with the module's forward.
    input_dim, hidden_dim = 16, 32
    num_embeddings, embedding_dim = 64, 8

    key = jax.random.PRNGKey(0)
    kp, kx1, kx2 = jax.random.split(key, 3)
    params = init_params(kp, input_dim, hidden_dim, num_embeddings, embedding_dim)

    # 1) tiny batch: single tile
    x_small = jax.random.normal(kx1, (8, input_dim), jnp.float32)
    outs = jax.block_until_ready(vqvae_forward(x_small, params))
    _check_against_reference(x_small, params, outs)

    # 2) larger batch with an explicit small tile: multi-tile grid + partial
    #    final tile (no wrapper-side pad/copy of x)
    x_big = jax.random.normal(kx2, (1000, input_dim), jnp.float32)
    outs_small_tile = jax.block_until_ready(vqvae_forward(x_big, params, block_b=256))
    _check_against_reference(x_big, params, outs_small_tile)

    # 3) default large batch tile (the main perf lever): B=1000 splits into two
    #    ~500-row tiles so a v7x megacore still shards the batch axis
    outs_default = jax.block_until_ready(vqvae_forward(x_big, params))
    _check_against_reference(x_big, params, outs_default)

    print("KERNEL_OK")
</pallas_src>

<mosaic_0001>
module attributes {stable_mosaic.version = 11 : i64} {
  func.func @vqvae_kernel(%arg0: i32, %arg1: memref<8x16xf32, #tpu.memory_space<vmem>>, %arg2: memref<16x32xf32, #tpu.memory_space<vmem>>, %arg3: memref<1x32xf32, #tpu.memory_space<vmem>>, %arg4: memref<32x8xf32, #tpu.memory_space<vmem>>, %arg5: memref<1x8xf32, #tpu.memory_space<vmem>>, %arg6: memref<64x8xf32, #tpu.memory_space<vmem>>, %arg7: memref<8x64xf32, #tpu.memory_space<vmem>>, %arg8: memref<1x64xf32, #tpu.memory_space<vmem>>, %arg9: memref<8x32xf32, #tpu.memory_space<vmem>>, %arg10: memref<1x32xf32, #tpu.memory_space<vmem>>, %arg11: memref<32x128xf32, #tpu.memory_space<vmem>>, %arg12: memref<1x128xf32, #tpu.memory_space<vmem>>, %arg13: memref<8x128xf32, #tpu.memory_space<vmem>>, %arg14: memref<8x128xf32, #tpu.memory_space<vmem>>, %arg15: memref<1x128xf32, #tpu.memory_space<vmem>>, %arg16: memref<8x128xf32, #tpu.memory_space<vmem>>) attributes {dimension_semantics = [#tpu.dimension_semantics<parallel>], iteration_bounds = array<i64: 1>, scalar_prefetch = 0 : i64, scratch_operands = 0 : i64, tpu.core_type = #tpu.core_type<tc>, window_params = [{transform_indices = @transform_0, window_bounds = array<i64: 8, 16>}, {pipeline_mode = #tpu.pipeline_mode<synchronous>, transform_indices = @transform_1, window_bounds = array<i64: 16, 32>}, {pipeline_mode = #tpu.pipeline_mode<synchronous>, transform_indices = @transform_2, window_bounds = array<i64: 1, 32>}, {pipeline_mode = #tpu.pipeline_mode<synchronous>, transform_indices = @transform_3, window_bounds = array<i64: 32, 8>}, {pipeline_mode = #tpu.pipeline_mode<synchronous>, transform_indices = @transform_4, window_bounds = array<i64: 1, 8>}, {pipeline_mode = #tpu.pipeline_mode<synchronous>, transform_indices = @transform_5, window_bounds = array<i64: 64, 8>}, {pipeline_mode = #tpu.pipeline_mode<synchronous>, transform_indices = @transform_6, window_bounds = array<i64: 8, 64>}, {pipeline_mode = #tpu.pipeline_mode<synchronous>, transform_indices = @transform_7, window_bounds = array<i64: 1, 64>}, {pipeline_mode = #tpu.pipeline_mode<synchronous>, transform_indices = @transform_8, window_bounds = array<i64: 8, 32>}, {pipeline_mode = #tpu.pipeline_mode<synchronous>, transform_indices = @transform_9, window_bounds = array<i64: 1, 32>}, {pipeline_mode = #tpu.pipeline_mode<synchronous>, transform_indices = @transform_10, window_bounds = array<i64: 32, 128>}, {pipeline_mode = #tpu.pipeline_mode<synchronous>, transform_indices = @transform_11, window_bounds = array<i64: 1, 128>}, {pipeline_mode = #tpu.pipeline_mode<synchronous>, transform_indices = @transform_12, window_bounds = array<i64: 8, 128>}, {pipeline_mode = #tpu.pipeline_mode<synchronous>, transform_indices = @transform_13, window_bounds = array<i64: 8, 128>}, {pipeline_mode = #tpu.pipeline_mode<synchronous>, transform_indices = @transform_14, window_bounds = array<i64: 1, 128>}, {transform_indices = @transform_15, window_bounds = array<i64: 8, 128>}]} {
    %c0 = arith.constant 0 : index
    %c0_0 = arith.constant 0 : index
    %0 = vector.load %arg1[%c0, %c0_0] : memref<8x16xf32, #tpu.memory_space<vmem>>, vector<8x16xf32>
    %c0_1 = arith.constant 0 : index
    %c0_2 = arith.constant 0 : index
    %1 = vector.load %arg2[%c0_1, %c0_2] : memref<16x32xf32, #tpu.memory_space<vmem>>, vector<16x32xf32>
    %cst = arith.constant dense<0.000000e+00> : vector<8x32xf32>
    %2 = tpu.matmul %0, %1, %cst {dimension_numbers = #tpu.dot_dimension_numbers<[1], [0], [0], [1], [0, 0, 1, 1], [], []>} : vector<8x16xf32>, vector<16x32xf32>, vector<8x32xf32> -> vector<8x32xf32>
    %c0_3 = arith.constant 0 : index
    %c0_4 = arith.constant 0 : index
    %3 = vector.load %arg3[%c0_3, %c0_4] : memref<1x32xf32, #tpu.memory_space<vmem>>, vector<1x32xf32>
    %4 = vector.broadcast %3 : vector<1x32xf32> to vector<8x32xf32>
    %5 = arith.addf %2, %4 : vector<8x32xf32>
    %cst_5 = arith.constant 0.000000e+00 : f32
    %6 = vector.broadcast %cst_5 : f32 to vector<8x32xf32>
    %7 = arith.maximumf %5, %6 : vector<8x32xf32>
    %c0_6 = arith.constant 0 : index
    %c0_7 = arith.constant 0 : index
    %8 = vector.load %arg4[%c0_6, %c0_7] : memref<32x8xf32, #tpu.memory_space<vmem>>, vector<32x8xf32>
    %cst_8 = arith.constant dense<0.000000e+00> : vector<8x8xf32>
    %9 = tpu.matmul %7, %8, %cst_8 {dimension_numbers = #tpu.dot_dimension_numbers<[1], [0], [0], [1], [0, 0, 1, 1], [], []>} : vector<8x32xf32>, vector<32x8xf32>, vector<8x8xf32> -> vector<8x8xf32>
    %c0_9 = arith.constant 0 : index
    %c0_10 = arith.constant 0 : index
    %10 = vector.load %arg5[%c0_9, %c0_10] : memref<1x8xf32, #tpu.memory_space<vmem>>, vector<1x8xf32>
    %11 = vector.broadcast %10 : vector<1x8xf32> to vector<8x8xf32>
    %12 = arith.addf %9, %11 : vector<8x8xf32>
    %c0_11 = arith.constant 0 : index
    %c0_12 = arith.constant 0 : index
    %13 = vector.load %arg6[%c0_11, %c0_12] : memref<64x8xf32, #tpu.memory_space<vmem>>, vector<64x8xf32>
    %14 = arith.mulf %12, %12 : vector<8x8xf32>
    %cst_13 = arith.constant dense<0.000000e+00> : vector<8xf32>
    %15 = vector.multi_reduction <add>, %14, %cst_13 [1] : vector<8x8xf32> to vector<8xf32>
    %16 = vector.shape_cast %15 : vector<8xf32> to vector<8x1xf32>
    %c0_14 = arith.constant 0 : index
    %c0_15 = arith.constant 0 : index
    %17 = vector.load %arg7[%c0_14, %c0_15] : memref<8x64xf32, #tpu.memory_space<vmem>>, vector<8x64xf32>
    %cst_16 = arith.constant dense<0.000000e+00> : vector<8x64xf32>
    %18 = tpu.matmul %12, %17, %cst_16 {dimension_numbers = #tpu.dot_dimension_numbers<[1], [0], [0], [1], [0, 0, 1, 1], [], []>} : vector<8x8xf32>, vector<8x64xf32>, vector<8x64xf32> -> vector<8x64xf32>
    %c0_17 = arith.constant 0 : index
    %c0_18 = arith.constant 0 : index
    %19 = vector.load %arg8[%c0_17, %c0_18] : memref<1x64xf32, #tpu.memory_space<vmem>>, vector<1x64xf32>
    %20 = vector.broadcast %16 : vector<8x1xf32> to vector<8x64xf32>
    %21 = vector.broadcast %19 : vector<1x64xf32> to vector<8x64xf32>
    %22 = arith.addf %20, %21 : vector<8x64xf32>
    %cst_19 = arith.constant 2.000000e+00 : f32
    %23 = vector.broadcast %cst_19 : f32 to vector<8x64xf32>
    %24 = arith.mulf %23, %18 : vector<8x64xf32>
    %25 = arith.subf %22, %24 : vector<8x64xf32>
    %cst_20 = arith.constant dense<0x7F800000> : vector<8xf32>
    %26 = vector.multi_reduction <minimumf>, %25, %cst_20 [1] : vector<8x64xf32> to vector<8xf32>
    %27 = vector.shape_cast %26 : vector<8xf32> to vector<8x1xf32>
    %28 = tpu.iota {dimensions = array<i32: 1>} : vector<8x64xi32>
    %29 = vector.broadcast %27 : vector<8x1xf32> to vector<8x64xf32>
    %30 = arith.cmpf oeq, %25, %29 : vector<8x64xf32>
    %c64_i32 = arith.constant 64 : i32
    %31 = vector.broadcast %c64_i32 : i32 to vector<8x64xi32>
    %32 = arith.select %30, %28, %31 : vector<8x64xi1>, vector<8x64xi32>
    %cst_21 = arith.constant dense<2147483647> : vector<8xi32>
    %33 = vector.multi_reduction <minsi>, %32, %cst_21 [1] : vector<8x64xi32> to vector<8xi32>
    %34 = vector.shape_cast %33 : vector<8xi32> to vector<8x1xi32>
    %35 = vector.broadcast %34 : vector<8x1xi32> to vector<8x64xi32>
    %36 = arith.cmpi eq, %28, %35 : vector<8x64xi32>
    %37 = arith.extui %36 : vector<8x64xi1> to vector<8x64xi32>
    %38 = arith.sitofp %37 : vector<8x64xi32> to vector<8x64xf32>
    %cst_22 = arith.constant dense<0.000000e+00> : vector<8x8xf32>
    %39 = tpu.matmul %38, %13, %cst_22 {dimension_numbers = #tpu.dot_dimension_numbers<[1], [0], [0], [1], [0, 0, 1, 1], [], []>} : vector<8x64xf32>, vector<64x8xf32>, vector<8x8xf32> -> vector<8x8xf32>
    %40 = arith.subf %12, %39 : vector<8x8xf32>
    %41 = arith.addf %39, %40 : vector<8x8xf32>
    %c0_23 = arith.constant 0 : index
    %c0_24 = arith.constant 0 : index
    %42 = vector.load %arg9[%c0_23, %c0_24] : memref<8x32xf32, #tpu.memory_space<vmem>>, vector<8x32xf32>
    %cst_25 = arith.constant dense<0.000000e+00> : vector<8x32xf32>
    %43 = tpu.matmul %41, %42, %cst_25 {dimension_numbers = #tpu.dot_dimension_numbers<[1], [0], [0], [1], [0, 0, 1, 1], [], []>} : vector<8x8xf32>, vector<8x32xf32>, vector<8x32xf32> -> vector<8x32xf32>
    %c0_26 = arith.constant 0 : index
    %c0_27 = arith.constant 0 : index
    %44 = vector.load %arg10[%c0_26, %c0_27] : memref<1x32xf32, #tpu.memory_space<vmem>>, vector<1x32xf32>
    %45 = vector.broadcast %44 : vector<1x32xf32> to vector<8x32xf32>
    %46 = arith.addf %43, %45 : vector<8x32xf32>
    %cst_28 = arith.constant 0.000000e+00 : f32
    %47 = vector.broadcast %cst_28 : f32 to vector<8x32xf32>
    %48 = arith.maximumf %46, %47 : vector<8x32xf32>
    %c0_29 = arith.constant 0 : index
    %c0_30 = arith.constant 0 : index
    %49 = vector.load %arg11[%c0_29, %c0_30] : memref<32x128xf32, #tpu.memory_space<vmem>>, vector<32x128xf32>
    %cst_31 = arith.constant dense<0.000000e+00> : vector<8x128xf32>
    %50 = tpu.matmul %48, %49, %cst_31 {dimension_numbers = #tpu.dot_dimension_numbers<[1], [0], [0], [1], [0, 0, 1, 1], [], []>} : vector<8x32xf32>, vector<32x128xf32>, vector<8x128xf32> -> vector<8x128xf32>
    %c0_32 = arith.constant 0 : index
    %c0_33 = arith.constant 0 : index
    %51 = vector.load %arg12[%c0_32, %c0_33] : memref<1x128xf32, #tpu.memory_space<vmem>>, vector<1x128xf32>
    %52 = vector.broadcast %51 : vector<1x128xf32> to vector<8x128xf32>
    %53 = arith.addf %50, %52 : vector<8x128xf32>
    %c0_34 = arith.constant 0 : index
    %c0_35 = arith.constant 0 : index
    %54 = vector.load %arg13[%c0_34, %c0_35] : memref<8x128xf32, #tpu.memory_space<vmem>>, vector<8x128xf32>
    %cst_36 = arith.constant dense<0.000000e+00> : vector<8x128xf32>
    %55 = tpu.matmul %12, %54, %cst_36 {dimension_numbers = #tpu.dot_dimension_numbers<[1], [0], [0], [1], [0, 0, 1, 1], [], []>} : vector<8x8xf32>, vector<8x128xf32>, vector<8x128xf32> -> vector<8x128xf32>
    %56 = arith.addf %53, %55 : vector<8x128xf32>
    %c0_37 = arith.constant 0 : index
    %c0_38 = arith.constant 0 : index
    %57 = vector.load %arg14[%c0_37, %c0_38] : memref<8x128xf32, #tpu.memory_space<vmem>>, vector<8x128xf32>
    %cst_39 = arith.constant dense<0.000000e+00> : vector<8x128xf32>
    %58 = tpu.matmul %41, %57, %cst_39 {dimension_numbers = #tpu.dot_dimension_numbers<[1], [0], [0], [1], [0, 0, 1, 1], [], []>} : vector<8x8xf32>, vector<8x128xf32>, vector<8x128xf32> -> vector<8x128xf32>
    %59 = arith.addf %56, %58 : vector<8x128xf32>
    %60 = arith.sitofp %34 : vector<8x1xi32> to vector<8x1xf32>
    %c0_40 = arith.constant 0 : index
    %c0_41 = arith.constant 0 : index
    %61 = vector.load %arg15[%c0_40, %c0_41] : memref<1x128xf32, #tpu.memory_space<vmem>>, vector<1x128xf32>
    %62 = vector.broadcast %60 : vector<8x1xf32> to vector<8x128xf32>
    %63 = vector.broadcast %61 : vector<1x128xf32> to vector<8x128xf32>
    %64 = arith.mulf %62, %63 : vector<8x128xf32>
    %65 = arith.addf %59, %64 : vector<8x128xf32>
    %c0_42 = arith.constant 0 : index
    %c0_43 = arith.constant 0 : index
    %66 = vector.load %arg16[%c0_42, %c0_43] : memref<8x128xf32, #tpu.memory_space<vmem>>, vector<8x128xf32>
    tpu.vector_store %arg16[%c0_42, %c0_43], %65 {strides = array<i32>} : memref<8x128xf32, #tpu.memory_space<vmem>>, vector<8x128xf32>,
    return
  }
  func.func @transform_0(%arg0: i32) -> (i32, i32) {
    %c0_i32 = arith.constant 0 : i32
    %c0_i32_0 = arith.constant 0 : i32
    return %arg0, %c0_i32 : i32, i32
  }
  func.func @transform_1(%arg0: i32) -> (i32, i32) {
    %c0_i32 = arith.constant 0 : i32
    %c0_i32_0 = arith.constant 0 : i32
    %c0_i32_1 = arith.constant 0 : i32
    return %c0_i32, %c0_i32_0 : i32, i32
  }
  func.func @transform_2(%arg0: i32) -> (i32, i32) {
    %c0_i32 = arith.constant 0 : i32
    %c0_i32_0 = arith.constant 0 : i32
    %c0_i32_1 = arith.constant 0 : i32
    return %c0_i32, %c0_i32_0 : i32, i32
  }
  func.func @transform_3(%arg0: i32) -> (i32, i32) {
    %c0_i32 = arith.constant 0 : i32
    %c0_i32_0 = arith.constant 0 : i32
    %c0_i32_1 = arith.constant 0 : i32
    return %c0_i32, %c0_i32_0 : i32, i32
  }
  func.func @transform_4(%arg0: i32) -> (i32, i32) {
    %c0_i32 = arith.constant 0 : i32
    %c0_i32_0 = arith.constant 0 : i32
    %c0_i32_1 = arith.constant 0 : i32
    return %c0_i32, %c0_i32_0 : i32, i32
  }
  func.func @transform_5(%arg0: i32) -> (i32, i32) {
    %c0_i32 = arith.constant 0 : i32
    %c0_i32_0 = arith.constant 0 : i32
    %c0_i32_1 = arith.constant 0 : i32
    return %c0_i32, %c0_i32_0 : i32, i32
  }
  func.func @transform_6(%arg0: i32) -> (i32, i32) {
    %c0_i32 = arith.constant 0 : i32
    %c0_i32_0 = arith.constant 0 : i32
    %c0_i32_1 = arith.constant 0 : i32
    return %c0_i32, %c0_i32_0 : i32, i32
  }
  func.func @transform_7(%arg0: i32) -> (i32, i32) {
    %c0_i32 = arith.constant 0 : i32
    %c0_i32_0 = arith.constant 0 : i32
    %c0_i32_1 = arith.constant 0 : i32
    return %c0_i32, %c0_i32_0 : i32, i32
  }
  func.func @transform_8(%arg0: i32) -> (i32, i32) {
    %c0_i32 = arith.constant 0 : i32
    %c0_i32_0 = arith.constant 0 : i32
    %c0_i32_1 = arith.constant 0 : i32
    return %c0_i32, %c0_i32_0 : i32, i32
  }
  func.func @transform_9(%arg0: i32) -> (i32, i32) {
    %c0_i32 = arith.constant 0 : i32
    %c0_i32_0 = arith.constant 0 : i32
    %c0_i32_1 = arith.constant 0 : i32
    return %c0_i32, %c0_i32_0 : i32, i32
  }
  func.func @transform_10(%arg0: i32) -> (i32, i32) {
    %c0_i32 = arith.constant 0 : i32
    %c0_i32_0 = arith.constant 0 : i32
    %c0_i32_1 = arith.constant 0 : i32
    return %c0_i32, %c0_i32_0 : i32, i32
  }
  func.func @transform_11(%arg0: i32) -> (i32, i32) {
    %c0_i32 = arith.constant 0 : i32
    %c0_i32_0 = arith.constant 0 : i32
    %c0_i32_1 = arith.constant 0 : i32
    return %c0_i32, %c0_i32_0 : i32, i32
  }
  func.func @transform_12(%arg0: i32) -> (i32, i32) {
    %c0_i32 = arith.constant 0 : i32
    %c0_i32_0 = arith.constant 0 : i32
    %c0_i32_1 = arith.constant 0 : i32
    return %c0_i32, %c0_i32_0 : i32, i32
  }
  func.func @transform_13(%arg0: i32) -> (i32, i32) {
    %c0_i32 = arith.constant 0 : i32
    %c0_i32_0 = arith.constant 0 : i32
    %c0_i32_1 = arith.constant 0 : i32
    return %c0_i32, %c0_i32_0 : i32, i32
  }
  func.func @transform_14(%arg0: i32) -> (i32, i32) {
    %c0_i32 = arith.constant 0 : i32
    %c0_i32_0 = arith.constant 0 : i32
    %c0_i32_1 = arith.constant 0 : i32
    return %c0_i32, %c0_i32_0 : i32, i32
  }
  func.func @transform_15(%arg0: i32) -> (i32, i32) {
    %c0_i32 = arith.constant 0 : i32
    %c0_i32_0 = arith.constant 0 : i32
    return %arg0, %c0_i32 : i32, i32
  }
}

</mosaic_0001>

<llo_original>
// kernel: tpu_custom_call.1
$region0: #{tpu_custom_call.1}
  #allocation0 [shape = 'u32[]', space=smem, size = 0x4, offset = 0x4, fixed_abs, tag = 'smem constant byte address 0x4 - core index']
  #allocation1 [shape = 'u32[144,128]{1,0:T(1,128)}', space=vmem, size = 0x12000, scoped, tag = 'internal scratch']
  %s0 = inlined_call_operand.vmem [shape: f32[8,16], index: 0, kind: input, shape index: {}]
  %s1 = inlined_call_operand.vmem [shape: f32[16,32], index: 1, kind: input, shape index: {}]
  %s2 = inlined_call_operand.vmem [shape: f32[1,32], index: 2, kind: input, shape index: {}]
  %s3 = inlined_call_operand.vmem [shape: f32[32,8], index: 3, kind: input, shape index: {}]
  %s4 = inlined_call_operand.vmem [shape: f32[1,8], index: 4, kind: input, shape index: {}]
  %s5 = inlined_call_operand.vmem [shape: f32[64,8], index: 5, kind: input, shape index: {}]
  %s6 = inlined_call_operand.vmem [shape: f32[8,64], index: 6, kind: input, shape index: {}]
  %s7 = inlined_call_operand.vmem [shape: f32[1,64], index: 7, kind: input, shape index: {}]
  %s8 = inlined_call_operand.vmem [shape: f32[8,32], index: 8, kind: input, shape index: {}]
  %s9 = inlined_call_operand.vmem [shape: f32[1,32], index: 9, kind: input, shape index: {}]
  %s10 = inlined_call_operand.vmem [shape: f32[32,128], index: 10, kind: input, shape index: {}]
  %s11 = inlined_call_operand.vmem [shape: f32[1,128], index: 11, kind: input, shape index: {}]
  %s12 = inlined_call_operand.vmem [shape: f32[8,128], index: 12, kind: input, shape index: {}]
  %s13 = inlined_call_operand.vmem [shape: f32[8,128], index: 13, kind: input, shape index: {}]
  %s14 = inlined_call_operand.vmem [shape: f32[1,128], index: 14, kind: input, shape index: {}]
  %s15 = inlined_call_operand.hbm [shape: f32[8,128], index: 15, kind: output, shape index: {}]
  %s16 = sld [smem:[#allocation0]]
  $region70: #{tpu_custom_call.1} parent=0
    _
  %s18 = ssub.s32 1, %s16
  %s19 = scalar_select 0, %s18, %s16
  $region1: #{tpu_custom_call.1} parent=0
    #allocation2 [shape = 'u8[4096]{0}', space=vmem, size = 0x1000, scoped, tag = 'output window, operand 0, single buffered']
    #allocation3 [shape = 's32[1]{0}', space=sflag, size = 0x4, scoped, tag = 'scoped memory for tpu_custom_call.1']
    %20 = vsyncpa [#allocation3], 0
    // Predicated region
    $region2: #{tpu_custom_call.1} parent=1 // pred_check
      _
    $region3: #{tpu_custom_call.1} parent=1 // pred_check_branch
      %22 = sbr.rel (0) target = $region5
    $region4: #{tpu_custom_call.1} parent=1 // pred_region
      _
    $region5: #{tpu_custom_call.1} parent=1 // pred_fallthru
      _
    // Predicated region
    $region6: #{tpu_custom_call.1} parent=1 // pred_check
      _
    $region7: #{tpu_custom_call.1} parent=1 // pred_check_branch
      %24 = sbr.rel (0) target = $region9
    $region8: #{tpu_custom_call.1} parent=1 // pred_region
      _
    $region9: #{tpu_custom_call.1} parent=1 // pred_fallthru
      _
    // Predicated region
    $region10: #{tpu_custom_call.1} parent=1 // pred_check
      _
    $region11: #{tpu_custom_call.1} parent=1 // pred_check_branch
      %26 = sbr.rel (0) target = $region13
    $region12: #{tpu_custom_call.1} parent=1 // pred_region
      _
    $region13: #{tpu_custom_call.1} parent=1 // pred_fallthru
      _
    // Predicated region
    $region14: #{tpu_custom_call.1} parent=1 // pred_check
      _
    $region15: #{tpu_custom_call.1} parent=1 // pred_check_branch
      %28 = sbr.rel (0) target = $region17
    $region16: #{tpu_custom_call.1} parent=1 // pred_region
      _
    $region17: #{tpu_custom_call.1} parent=1 // pred_fallthru
      _
    // Predicated region
    $region18: #{tpu_custom_call.1} parent=1 // pred_check
      _
    $region19: #{tpu_custom_call.1} parent=1 // pred_check_branch
      %30 = sbr.rel (0) target = $region21
    $region20: #{tpu_custom_call.1} parent=1 // pred_region
      _
    $region21: #{tpu_custom_call.1} parent=1 // pred_fallthru
      _
    // Predicated region
    $region22: #{tpu_custom_call.1} parent=1 // pred_check
      _
    $region23: #{tpu_custom_call.1} parent=1 // pred_check_branch
      %32 = sbr.rel (0) target = $region25
    $region24: #{tpu_custom_call.1} parent=1 // pred_region
      _
    $region25: #{tpu_custom_call.1} parent=1 // pred_fallthru
      _
    // Predicated region
    $region26: #{tpu_custom_call.1} parent=1 // pred_check
      _
    $region27: #{tpu_custom_call.1} parent=1 // pred_check_branch
      %34 = sbr.rel (0) target = $region29
    $region28: #{tpu_custom_call.1} parent=1 // pred_region
      _
    $region29: #{tpu_custom_call.1} parent=1 // pred_fallthru
      _
    // Predicated region
    $region30: #{tpu_custom_call.1} parent=1 // pred_check
      _
    $region31: #{tpu_custom_call.1} parent=1 // pred_check_branch
      %36 = sbr.rel (0) target = $region33
    $region32: #{tpu_custom_call.1} parent=1 // pred_region
      _
    $region33: #{tpu_custom_call.1} parent=1 // pred_fallthru
      _
    // Predicated region
    $region34: #{tpu_custom_call.1} parent=1 // pred_check
      _
    $region35: #{tpu_custom_call.1} parent=1 // pred_check_branch
      %38 = sbr.rel (0) target = $region37
    $region36: #{tpu_custom_call.1} parent=1 // pred_region
      _
    $region37: #{tpu_custom_call.1} parent=1 // pred_fallthru
      _
    // Predicated region
    $region38: #{tpu_custom_call.1} parent=1 // pred_check
      _
    $region39: #{tpu_custom_call.1} parent=1 // pred_check_branch
      %40 = sbr.rel (0) target = $region41
    $region40: #{tpu_custom_call.1} parent=1 // pred_region
      _
    $region41: #{tpu_custom_call.1} parent=1 // pred_fallthru
      _
    // Predicated region
    $region42: #{tpu_custom_call.1} parent=1 // pred_check
      _
    $region43: #{tpu_custom_call.1} parent=1 // pred_check_branch
      %42 = sbr.rel (0) target = $region45
    $region44: #{tpu_custom_call.1} parent=1 // pred_region
      _
    $region45: #{tpu_custom_call.1} parent=1 // pred_fallthru
      _
    // Predicated region
    $region46: #{tpu_custom_call.1} parent=1 // pred_check
      _
    $region47: #{tpu_custom_call.1} parent=1 // pred_check_branch
      %44 = sbr.rel (0) target = $region49
    $region48: #{tpu_custom_call.1} parent=1 // pred_region
      _
    $region49: #{tpu_custom_call.1} parent=1 // pred_fallthru
      _
    // Predicated region
    $region50: #{tpu_custom_call.1} parent=1 // pred_check
      _
    $region51: #{tpu_custom_call.1} parent=1 // pred_check_branch
      %46 = sbr.rel (0) target = $region53
    $region52: #{tpu_custom_call.1} parent=1 // pred_region
      _
    $region53: #{tpu_custom_call.1} parent=1 // pred_fallthru
      _
    // Predicated region
    $region54: #{tpu_custom_call.1} parent=1 // pred_check
      _
    $region55: #{tpu_custom_call.1} parent=1 // pred_check_branch
      %48 = sbr.rel (0) target = $region57
    $region56: #{tpu_custom_call.1} parent=1 // pred_region
      _
    $region57: #{tpu_custom_call.1} parent=1 // pred_fallthru
      _
    // Predicated region
    $region58: #{tpu_custom_call.1} parent=1 // pred_check
      _
    $region59: #{tpu_custom_call.1} parent=1 // pred_check_branch
      %50 = sbr.rel (0) target = $region61
    $region60: #{tpu_custom_call.1} parent=1 // pred_region
      _
    $region61: #{tpu_custom_call.1} parent=1 // pred_fallthru
      _
    %v51 = vld [vmem:[%s0] sm:$0xff]
    %v52 = vld [vmem:[%s1] sm:$0xff]
    %v53 = vld [vmem:[%s1 + $0x8] sm:$0xff]
    %v54 = vld [vmem:[%s2] sm:$0x1]
    %v56 = vlaneseq
    %v57 = vshrl.u32 %v56, 7
    %v58 = vsub.s32 0, %v57
    %v59 = vrot.slane %v54, %v58
    %vm61 = vcmask 130048
    %v63 = vsel %vm61, %v51, 0
    %65 = vmatprep.subr.mxu0 0.0
    %66 = vmatpush1.msra.mxu0 %v52
    %67 = vmatprep.subr.mxu0 0.0
    %68 = vmatpush1.msra.mxu0 %v53
    %69 = vmatprep.subr.mxu0 0.0
    %70 = vmatpush1.msra.mxu0 0.0
    %71 = vmatprep.subr.mxu0 0.0
    %72 = vmatpush1.msra.mxu0 0.0
    %73 = vmatprep.subr.mxu0 0.0
    %74 = vmatpush1.msra.mxu0 0.0
    %75 = vmatprep.subr.mxu0 0.0
    %76 = vmatpush1.msra.mxu0 0.0
    %77 = vmatprep.subr.mxu0 0.0
    %78 = vmatpush1.msra.mxu0 0.0
    %79 = vmatprep.subr.mxu0 0.0
    %80 = vmatpush1.msra.mxu0 0.0
    %81 = vmatprep.subr.mxu0 0.0
    %82 = vmatpush1.msra.mxu0 0.0
    %83 = vmatprep.subr.mxu0 0.0
    %84 = vmatpush1.msra.mxu0 0.0
    %85 = vmatprep.subr.mxu0 0.0
    %86 = vmatpush1.msra.mxu0 0.0
    %87 = vmatprep.subr.mxu0 0.0
    %88 = vmatpush1.msra.mxu0 0.0
    %89 = vmatprep.subr.mxu0 0.0
    %90 = vmatpush1.msra.mxu0 0.0
    %91 = vmatprep.subr.mxu0 0.0
    %92 = vmatpush1.msra.mxu0 0.0
    %93 = vmatprep.subr.mxu0 0.0
    %94 = vmatpush1.msra.mxu0 0.0
    %95 = vmatprep.subr.mxu0 0.0
    %96 = vmatpush1.msra.mxu0 0.0
    %97 = vmatprep.subr.mxu0 0.0
    %98 = vmatpush1.msra.mxu0 0.0
    %99 = vmatprep.subr.mxu0 0.0
    %100 = vmatpush1.msra.mxu0 0.0
    %101 = vmatprep.subr.mxu0 0.0
    %102 = vmatpush1.msra.mxu0 0.0
    %103 = vmatprep.subr.mxu0 0.0
    %104 = vmatpush1.msra.mxu0 0.0
    %105 = vmatprep.subr.mxu0 0.0
    %106 = vmatpush1.msra.mxu0 0.0
    %107 = vmatprep.subr.mxu0 0.0
    %108 = vmatpush1.msra.mxu0 0.0
    %109 = vmatprep.subr.mxu0 0.0
    %110 = vmatpush1.msra.mxu0 0.0
    %111 = vmatprep.subr.mxu0 0.0
    %112 = vmatpush1.msra.mxu0 0.0
    %113 = vmatprep.subr.mxu0 0.0
    %114 = vmatpush1.msra.mxu0 0.0
    %115 = vmatprep.subr.mxu0 0.0
    %116 = vmatpush1.msra.mxu0 0.0
    %117 = vmatprep.subr.mxu0 0.0
    %118 = vmatpush1.msra.mxu0 0.0
    %119 = vmatprep.subr.mxu0 0.0
    %120 = vmatpush1.msra.mxu0 0.0
    %121 = vmatprep.subr.mxu0 0.0
    %122 = vmatpush1.msra.mxu0 0.0
    %123 = vmatprep.subr.mxu0 0.0
    %124 = vmatpush1.msra.mxu0 0.0
    %125 = vmatprep.subr.mxu0 0.0
    %126 = vmatpush1.msra.mxu0 0.0
    %127 = vmatprep.subr.mxu0 0.0
    %128 = vmatpush1.msra.mxu0 0.0
    %129 = vmatprep.mubr.f32.mxu0 0.0
    %130 = vmatmul.mubr.f32.gmra.mrb[0].mxu0 %v63
    %v131 = vpop.f32.mrb[0].mxu0
    %v132 = vadd.f32 %v59, %v131
    %v133 = vpop.f32.mrb[0].mxu0
    %134 = vdwg.mxu0
    %v135 = vmax.f32 %v132, 0.0
    %v136 = vld [vmem:[%s3] sm:$0xff]
    %v137 = vld [vmem:[%s3 + $0x8] sm:$0xff]
    %v138 = vld [vmem:[%s3 + $0x10] sm:$0xff]
    %v139 = vld [vmem:[%s3 + $0x18] sm:$0xff]
    %v140 = vld [vmem:[%s4] sm:$0x1]
    %v142 = vlaneseq
    %v143 = vshrl.u32 %v142, 7
    %v144 = vsub.s32 0, %v143
    %v145 = vrot.slane %v140, %v144
    %vm147 = vcmask 261120
    %v149 = vsel %vm147, %v135, 0
    %151 = vmatprep.subr.mxu0 0.0
    %152 = vmatpush1.msra.mxu0 %v136
    %153 = vmatprep.subr.mxu0 0.0
    %154 = vmatpush1.msra.mxu0 %v137
    %155 = vmatprep.subr.mxu0 0.0
    %156 = vmatpush1.msra.mxu0 %v138
    %157 = vmatprep.subr.mxu0 0.0
    %158 = vmatpush1.msra.mxu0 %v139
    %159 = vmatprep.subr.mxu0 0.0
    %160 = vmatpush1.msra.mxu0 0.0
    %161 = vmatprep.subr.mxu0 0.0
    %162 = vmatpush1.msra.mxu0 0.0
    %163 = vmatprep.subr.mxu0 0.0
    %164 = vmatpush1.msra.mxu0 0.0
    %165 = vmatprep.subr.mxu0 0.0
    %166 = vmatpush1.msra.mxu0 0.0
    %167 = vmatprep.subr.mxu0 0.0
    %168 = vmatpush1.msra.mxu0 0.0
    %169 = vmatprep.subr.mxu0 0.0
    %170 = vmatpush1.msra.mxu0 0.0
    %171 = vmatprep.subr.mxu0 0.0
    %172 = vmatpush1.msra.mxu0 0.0
    %173 = vmatprep.subr.mxu0 0.0
    %174 = vmatpush1.msra.mxu0 0.0
    %175 = vmatprep.subr.mxu0 0.0
    %176 = vmatpush1.msra.mxu0 0.0
    %177 = vmatprep.subr.mxu0 0.0
    %178 = vmatpush1.msra.mxu0 0.0
    %179 = vmatprep.subr.mxu0 0.0
    %180 = vmatpush1.msra.mxu0 0.0
    %181 = vmatprep.subr.mxu0 0.0
    %182 = vmatpush1.msra.mxu0 0.0
    %183 = vmatprep.subr.mxu0 0.0
    %184 = vmatpush1.msra.mxu0 0.0
    %185 = vmatprep.subr.mxu0 0.0
    %186 = vmatpush1.msra.mxu0 0.0
    %187 = vmatprep.subr.mxu0 0.0
    %188 = vmatpush1.msra.mxu0 0.0
    %189 = vmatprep.subr.mxu0 0.0
    %190 = vmatpush1.msra.mxu0 0.0
    %191 = vmatprep.subr.mxu0 0.0
    %192 = vmatpush1.msra.mxu0 0.0
    %193 = vmatprep.subr.mxu0 0.0
    %194 = vmatpush1.msra.mxu0 0.0
    %195 = vmatprep.subr.mxu0 0.0
    %196 = vmatpush1.msra.mxu0 0.0
    %197 = vmatprep.subr.mxu0 0.0
    %198 = vmatpush1.msra.mxu0 0.0
    %199 = vmatprep.subr.mxu0 0.0
    %200 = vmatpush1.msra.mxu0 0.0
    %201 = vmatprep.subr.mxu0 0.0
    %202 = vmatpush1.msra.mxu0 0.0
    %203 = vmatprep.subr.mxu0 0.0
    %204 = vmatpush1.msra.mxu0 0.0
    %205 = vmatprep.subr.mxu0 0.0
    %206 = vmatpush1.msra.mxu0 0.0
    %207 = vmatprep.subr.mxu0 0.0
    %208 = vmatpush1.msra.mxu0 0.0
    %209 = vmatprep.subr.mxu0 0.0
    %210 = vmatpush1.msra.mxu0 0.0
    %211 = vmatprep.subr.mxu0 0.0
    %212 = vmatpush1.msra.mxu0 0.0
    %213 = vmatprep.subr.mxu0 0.0
    %214 = vmatpush1.msra.mxu0 0.0
    %215 = vmatprep.mubr.f32.mxu0 0.0
    %216 = vmatmul.mubr.f32.gmra.mrb[0].mxu0 %v149
    %v217 = vpop.f32.mrb[0].mxu0
    %v218 = vadd.f32 %v145, %v217
    %v219 = vpop.f32.mrb[0].mxu0
    %220 = vdwg.mxu0
    %v221 = vld [vmem:[%s5] sm:$0xff]
    %v222 = vld [vmem:[%s5 + $0x8] sm:$0xff]
    %v223 = vld [vmem:[%s5 + $0x10] sm:$0xff]
    %v224 = vld [vmem:[%s5 + $0x18] sm:$0xff]
    %v225 = vld [vmem:[%s5 + $0x20] sm:$0xff]
    %v226 = vld [vmem:[%s5 + $0x28] sm:$0xff]
    %v227 = vld [vmem:[%s5 + $0x30] sm:$0xff]
    %v228 = vld [vmem:[%s5 + $0x38] sm:$0xff]
    %v229 = vmul.f32 %v218, %v218
    %vm230 = vcmask 64512
    %v231 = vsel %vm230, %v229, 0.0
    %232 = vadd.xlane.f32.xlu0 %v231
    %v233 = vpop.xlane.xlu0 %232
    %v234 = vld [vmem:[%s6] sm:$0xff]
    %v236 = vsel %vm230, %v218, 0
    %238 = vmatprep.subr.mxu0 0.0
    %239 = vmatpush1.msra.mxu0 %v234
    %240 = vmatprep.subr.mxu0 0.0
    %241 = vmatpush1.msra.mxu0 0.0
    %242 = vmatprep.subr.mxu0 0.0
    %243 = vmatpush1.msra.mxu0 0.0
    %244 = vmatprep.subr.mxu0 0.0
    %245 = vmatpush1.msra.mxu0 0.0
    %246 = vmatprep.subr.mxu0 0.0
    %247 = vmatpush1.msra.mxu0 0.0
    %248 = vmatprep.subr.mxu0 0.0
    %249 = vmatpush1.msra.mxu0 0.0
    %250 = vmatprep.subr.mxu0 0.0
    %251 = vmatpush1.msra.mxu0 0.0
    %252 = vmatprep.subr.mxu0 0.0
    %253 = vmatpush1.msra.mxu0 0.0
    %254 = vmatprep.subr.mxu0 0.0
    %255 = vmatpush1.msra.mxu0 0.0
    %256 = vmatprep.subr.mxu0 0.0
    %257 = vmatpush1.msra.mxu0 0.0
    %258 = vmatprep.subr.mxu0 0.0
    %259 = vmatpush1.msra.mxu0 0.0
    %260 = vmatprep.subr.mxu0 0.0
    %261 = vmatpush1.msra.mxu0 0.0
    %262 = vmatprep.subr.mxu0 0.0
    %263 = vmatpush1.msra.mxu0 0.0
    %264 = vmatprep.subr.mxu0 0.0
    %265 = vmatpush1.msra.mxu0 0.0
    %266 = vmatprep.subr.mxu0 0.0
    %267 = vmatpush1.msra.mxu0 0.0
    %268 = vmatprep.subr.mxu0 0.0
    %269 = vmatpush1.msra.mxu0 0.0
    %270 = vmatprep.subr.mxu0 0.0
    %271 = vmatpush1.msra.mxu0 0.0
    %272 = vmatprep.subr.mxu0 0.0
    %273 = vmatpush1.msra.mxu0 0.0
    %274 = vmatprep.subr.mxu0 0.0
    %275 = vmatpush1.msra.mxu0 0.0
    %276 = vmatprep.subr.mxu0 0.0
    %277 = vmatpush1.msra.mxu0 0.0
    %278 = vmatprep.subr.mxu0 0.0
    %279 = vmatpush1.msra.mxu0 0.0
    %280 = vmatprep.subr.mxu0 0.0
    %281 = vmatpush1.msra.mxu0 0.0
    %282 = vmatprep.subr.mxu0 0.0
    %283 = vmatpush1.msra.mxu0 0.0
    %284 = vmatprep.subr.mxu0 0.0
    %285 = vmatpush1.msra.mxu0 0.0
    %286 = vmatprep.subr.mxu0 0.0
    %287 = vmatpush1.msra.mxu0 0.0
    %288 = vmatprep.subr.mxu0 0.0
    %289 = vmatpush1.msra.mxu0 0.0
    %290 = vmatprep.subr.mxu0 0.0
    %291 = vmatpush1.msra.mxu0 0.0
    %292 = vmatprep.subr.mxu0 0.0
    %293 = vmatpush1.msra.mxu0 0.0
    %294 = vmatprep.subr.mxu0 0.0
    %295 = vmatpush1.msra.mxu0 0.0
    %296 = vmatprep.subr.mxu0 0.0
    %297 = vmatpush1.msra.mxu0 0.0
    %298 = vmatprep.subr.mxu0 0.0
    %299 = vmatpush1.msra.mxu0 0.0
    %300 = vmatprep.subr.mxu0 0.0
    %301 = vmatpush1.msra.mxu0 0.0
    %302 = vmatprep.mubr.f32.mxu0 0.0
    %303 = vmatmul.mubr.f32.gmra.mrb[0].mxu0 %v236
    %v304 = vpop.f32.mrb[0].mxu0
    %v305 = vadd.f32 0.0, %v304
    %v306 = vpop.f32.mrb[0].mxu0
    %307 = vdwg.mxu0
    %v308 = vld [vmem:[%s7] sm:$0x1]
    %v310 = vlaneseq
    %v311 = vshrl.u32 %v310, 7
    %v312 = vsub.s32 0, %v311
    %v313 = vrot.slane %v308, %v312
    %v315 = vadd.f32 %v233, %v313
    %v316 = vmul.f32 %v305, 2.0
    %v317 = vsub.f32 %v315, %v316
    %vm318 = vcmask 523264
    %v319 = vsel %vm318, %v317, inf
    %320 = vmin.xlane.f32.xlu0 %v319
    %v321 = vpop.xlane.xlu0 %320
    %v322 = vlaneseq
    %v323 = vand.u32 %v322, 127
    %vm324 = vcmp.eq.f32.partialorder %v317, %v321
    %v325 = vsel %vm324, %v323, 64
    %v326 = vsel %vm318, %v325, 2147483647
    %v327 = vand.u32 %v326, 65535
    %v328 = vshra.s32 %v326, 16
    %v329 = vcvt.s32.f32 %v327
    %v330 = vcvt.s32.f32 %v328
    %331 = vmin.xlane.f32.xlu0 %v330
    %v332 = vpop.xlane.xlu0 %331
    %vm333 = vcmp.eq.f32.partialorder %v330, %v332
    %v334 = vsel %vm333, %v329, inf
    %335 = vmin.xlane.f32.xlu0 %v334
    %v336 = vpop.xlane.xlu0 %335
    %v337 = vcvt.f32.s32 %v336
    %v338 = vcvt.f32.s32 %v332
    %v339 = vshll.u32 %v338, 16
    %v340 = vadd.s32 %v339, %v337
    %vm341 = vcmp.eq.s32.totalorder %v323, %v340
    %v342 = vsel %vm341, 1, 0
    %v343 = vcvt.s32.f32 %v342
    %v345 = vsel %vm318, %v343, 0
    %347 = vmatprep.subr.mxu0 0.0
    %348 = vmatpush1.msra.mxu0 %v221
    %349 = vmatprep.subr.mxu0 0.0
    %350 = vmatpush1.msra.mxu0 %v222
    %351 = vmatprep.subr.mxu0 0.0
    %352 = vmatpush1.msra.mxu0 %v223
    %353 = vmatprep.subr.mxu0 0.0
    %354 = vmatpush1.msra.mxu0 %v224
    %355 = vmatprep.subr.mxu0 0.0
    %356 = vmatpush1.msra.mxu0 %v225
    %357 = vmatprep.subr.mxu0 0.0
    %358 = vmatpush1.msra.mxu0 %v226
    %359 = vmatprep.subr.mxu0 0.0
    %360 = vmatpush1.msra.mxu0 %v227
    %361 = vmatprep.subr.mxu0 0.0
    %362 = vmatpush1.msra.mxu0 %v228
    %363 = vmatprep.subr.mxu0 0.0
    %364 = vmatpush1.msra.mxu0 0.0
    %365 = vmatprep.subr.mxu0 0.0
    %366 = vmatpush1.msra.mxu0 0.0
    %367 = vmatprep.subr.mxu0 0.0
    %368 = vmatpush1.msra.mxu0 0.0
    %369 = vmatprep.subr.mxu0 0.0
    %370 = vmatpush1.msra.mxu0 0.0
    %371 = vmatprep.subr.mxu0 0.0
    %372 = vmatpush1.msra.mxu0 0.0
    %373 = vmatprep.subr.mxu0 0.0
    %374 = vmatpush1.msra.mxu0 0.0
    %375 = vmatprep.subr.mxu0 0.0
    %376 = vmatpush1.msra.mxu0 0.0
    %377 = vmatprep.subr.mxu0 0.0
    %378 = vmatpush1.msra.mxu0 0.0
    %379 = vmatprep.subr.mxu0 0.0
    %380 = vmatpush1.msra.mxu0 0.0
    %381 = vmatprep.subr.mxu0 0.0
    %382 = vmatpush1.msra.mxu0 0.0
    %383 = vmatprep.subr.mxu0 0.0
    %384 = vmatpush1.msra.mxu0 0.0
    %385 = vmatprep.subr.mxu0 0.0
    %386 = vmatpush1.msra.mxu0 0.0
    %387 = vmatprep.subr.mxu0 0.0
    %388 = vmatpush1.msra.mxu0 0.0
    %389 = vmatprep.subr.mxu0 0.0
    %390 = vmatpush1.msra.mxu0 0.0
    %391 = vmatprep.subr.mxu0 0.0
    %392 = vmatpush1.msra.mxu0 0.0
    %393 = vmatprep.subr.mxu0 0.0
    %394 = vmatpush1.msra.mxu0 0.0
    %395 = vmatprep.subr.mxu0 0.0
    %396 = vmatpush1.msra.mxu0 0.0
    %397 = vmatprep.subr.mxu0 0.0
    %398 = vmatpush1.msra.mxu0 0.0
    %399 = vmatprep.subr.mxu0 0.0
    %400 = vmatpush1.msra.mxu0 0.0
    %401 = vmatprep.subr.mxu0 0.0
    %402 = vmatpush1.msra.mxu0 0.0
    %403 = vmatprep.subr.mxu0 0.0
    %404 = vmatpush1.msra.mxu0 0.0
    %405 = vmatprep.subr.mxu0 0.0
    %406 = vmatpush1.msra.mxu0 0.0
    %407 = vmatprep.subr.mxu0 0.0
    %408 = vmatpush1.msra.mxu0 0.0
    %409 = vmatprep.subr.mxu0 0.0
    %410 = vmatpush1.msra.mxu0 0.0
    %411 = vmatprep.mubr.f32.mxu0 0.0
    %412 = vmatmul.mubr.f32.gmra.mrb[0].mxu0 %v345
    %v413 = vpop.f32.mrb[0].mxu0
    %v414 = vadd.f32 0.0, %v413
    %v415 = vpop.f32.mrb[0].mxu0
    %416 = vdwg.mxu0
    %v417 = vsub.f32 %v218, %v414
    %v418 = vadd.f32 %v414, %v417
    %v419 = vld [vmem:[%s8] sm:$0xff]
    %v420 = vld [vmem:[%s9] sm:$0x1]
    %v422 = vlaneseq
    %v423 = vshrl.u32 %v422, 7
    %v424 = vsub.s32 0, %v423
    %v425 = vrot.slane %v420, %v424
    %v428 = vsel %vm230, %v418, 0
    %430 = vmatprep.subr.mxu0 0.0
    %431 = vmatpush1.msra.mxu0 %v419
    %432 = vmatprep.subr.mxu0 0.0
    %433 = vmatpush1.msra.mxu0 0.0
    %434 = vmatprep.subr.mxu0 0.0
    %435 = vmatpush1.msra.mxu0 0.0
    %436 = vmatprep.subr.mxu0 0.0
    %437 = vmatpush1.msra.mxu0 0.0
    %438 = vmatprep.subr.mxu0 0.0
    %439 = vmatpush1.msra.mxu0 0.0
    %440 = vmatprep.subr.mxu0 0.0
    %441 = vmatpush1.msra.mxu0 0.0
    %442 = vmatprep.subr.mxu0 0.0
    %443 = vmatpush1.msra.mxu0 0.0
    %444 = vmatprep.subr.mxu0 0.0
    %445 = vmatpush1.msra.mxu0 0.0
    %446 = vmatprep.subr.mxu0 0.0
    %447 = vmatpush1.msra.mxu0 0.0
    %448 = vmatprep.subr.mxu0 0.0
    %449 = vmatpush1.msra.mxu0 0.0
    %450 = vmatprep.subr.mxu0 0.0
    %451 = vmatpush1.msra.mxu0 0.0
    %452 = vmatprep.subr.mxu0 0.0
    %453 = vmatpush1.msra.mxu0 0.0
    %454 = vmatprep.subr.mxu0 0.0
    %455 = vmatpush1.msra.mxu0 0.0
    %456 = vmatprep.subr.mxu0 0.0
    %457 = vmatpush1.msra.mxu0 0.0
    %458 = vmatprep.subr.mxu0 0.0
    %459 = vmatpush1.msra.mxu0 0.0
    %460 = vmatprep.subr.mxu0 0.0
    %461 = vmatpush1.msra.mxu0 0.0
    %462 = vmatprep.subr.mxu0 0.0
    %463 = vmatpush1.msra.mxu0 0.0
    %464 = vmatprep.subr.mxu0 0.0
    %465 = vmatpush1.msra.mxu0 0.0
    %466 = vmatprep.subr.mxu0 0.0
    %467 = vmatpush1.msra.mxu0 0.0
    %468 = vmatprep.subr.mxu0 0.0
    %469 = vmatpush1.msra.mxu0 0.0
    %470 = vmatprep.subr.mxu0 0.0
    %471 = vmatpush1.msra.mxu0 0.0
    %472 = vmatprep.subr.mxu0 0.0
    %473 = vmatpush1.msra.mxu0 0.0
    %474 = vmatprep.subr.mxu0 0.0
    %475 = vmatpush1.msra.mxu0 0.0
    %476 = vmatprep.subr.mxu0 0.0
    %477 = vmatpush1.msra.mxu0 0.0
    %478 = vmatprep.subr.mxu0 0.0
    %479 = vmatpush1.msra.mxu0 0.0
    %480 = vmatprep.subr.mxu0 0.0
    %481 = vmatpush1.msra.mxu0 0.0
    %482 = vmatprep.subr.mxu0 0.0
    %483 = vmatpush1.msra.mxu0 0.0
    %484 = vmatprep.subr.mxu0 0.0
    %485 = vmatpush1.msra.mxu0 0.0
    %486 = vmatprep.subr.mxu0 0.0
    %487 = vmatpush1.msra.mxu0 0.0
    %488 = vmatprep.subr.mxu0 0.0
    %489 = vmatpush1.msra.mxu0 0.0
    %490 = vmatprep.subr.mxu0 0.0
    %491 = vmatpush1.msra.mxu0 0.0
    %492 = vmatprep.subr.mxu0 0.0
    %493 = vmatpush1.msra.mxu0 0.0
    %494 = vmatprep.mubr.f32.mxu0 0.0
    %495 = vmatmul.mubr.f32.gmra.mrb[0].mxu0 %v428
    %v496 = vpop.f32.mrb[0].mxu0
    %v497 = vadd.f32 %v425, %v496
    %v498 = vpop.f32.mrb[0].mxu0
    %499 = vdwg.mxu0
    %v500 = vmax.f32 %v497, 0.0
    %v501 = vld [vmem:[%s10] sm:$0xff]
    %v502 = vld [vmem:[%s10 + $0x8] sm:$0xff]
    %v503 = vld [vmem:[%s10 + $0x10] sm:$0xff]
    %v504 = vld [vmem:[%s10 + $0x18] sm:$0xff]
    %v505 = vld [vmem:[%s11] sm:$0x1]
    %v507 = vlaneseq
    %v508 = vshrl.u32 %v507, 7
    %v509 = vsub.s32 0, %v508
    %v510 = vrot.slane %v505, %v509
    %v513 = vsel %vm147, %v500, 0
    %515 = vmatprep.subr.mxu0 0.0
    %516 = vmatpush1.msra.mxu0 %v501
    %517 = vmatprep.subr.mxu0 0.0
    %518 = vmatpush1.msra.mxu0 %v502
    %519 = vmatprep.subr.mxu0 0.0
    %520 = vmatpush1.msra.mxu0 %v503
    %521 = vmatprep.subr.mxu0 0.0
    %522 = vmatpush1.msra.mxu0 %v504
    %523 = vmatprep.subr.mxu0 0.0
    %524 = vmatpush1.msra.mxu0 0.0
    %525 = vmatprep.subr.mxu0 0.0
    %526 = vmatpush1.msra.mxu0 0.0
    %527 = vmatprep.subr.mxu0 0.0
    %528 = vmatpush1.msra.mxu0 0.0
    %529 = vmatprep.subr.mxu0 0.0
    %530 = vmatpush1.msra.mxu0 0.0
    %531 = vmatprep.subr.mxu0 0.0
    %532 = vmatpush1.msra.mxu0 0.0
    %533 = vmatprep.subr.mxu0 0.0
    %534 = vmatpush1.msra.mxu0 0.0
    %535 = vmatprep.subr.mxu0 0.0
    %536 = vmatpush1.msra.mxu0 0.0
    %537 = vmatprep.subr.mxu0 0.0
    %538 = vmatpush1.msra.mxu0 0.0
    %539 = vmatprep.subr.mxu0 0.0
    %540 = vmatpush1.msra.mxu0 0.0
    %541 = vmatprep.subr.mxu0 0.0
    %542 = vmatpush1.msra.mxu0 0.0
    %543 = vmatprep.subr.mxu0 0.0
    %544 = vmatpush1.msra.mxu0 0.0
    %545 = vmatprep.subr.mxu0 0.0
    %546 = vmatpush1.msra.mxu0 0.0
    %547 = vmatprep.subr.mxu0 0.0
    %548 = vmatpush1.msra.mxu0 0.0
    %549 = vmatprep.subr.mxu0 0.0
    %550 = vmatpush1.msra.mxu0 0.0
    %551 = vmatprep.subr.mxu0 0.0
    %552 = vmatpush1.msra.mxu0 0.0
    %553 = vmatprep.subr.mxu0 0.0
    %554 = vmatpush1.msra.mxu0 0.0
    %555 = vmatprep.subr.mxu0 0.0
    %556 = vmatpush1.msra.mxu0 0.0
    %557 = vmatprep.subr.mxu0 0.0
    %558 = vmatpush1.msra.mxu0 0.0
    %559 = vmatprep.subr.mxu0 0.0
    %560 = vmatpush1.msra.mxu0 0.0
    %561 = vmatprep.subr.mxu0 0.0
    %562 = vmatpush1.msra.mxu0 0.0
    %563 = vmatprep.subr.mxu0 0.0
    %564 = vmatpush1.msra.mxu0 0.0
    %565 = vmatprep.subr.mxu0 0.0
    %566 = vmatpush1.msra.mxu0 0.0
    %567 = vmatprep.subr.mxu0 0.0
    %568 = vmatpush1.msra.mxu0 0.0
    %569 = vmatprep.subr.mxu0 0.0
    %570 = vmatpush1.msra.mxu0 0.0
    %571 = vmatprep.subr.mxu0 0.0
    %572 = vmatpush1.msra.mxu0 0.0
    %573 = vmatprep.subr.mxu0 0.0
    %574 = vmatpush1.msra.mxu0 0.0
    %575 = vmatprep.subr.mxu0 0.0
    %576 = vmatpush1.msra.mxu0 0.0
    %577 = vmatprep.subr.mxu0 0.0
    %578 = vmatpush1.msra.mxu0 0.0
    %579 = vmatprep.mubr.f32.mxu0 0.0
    %580 = vmatmul.mubr.f32.gmra.mrb[0].mxu0 %v513
    %v581 = vpop.f32.mrb[0].mxu0
    %v582 = vadd.f32 %v510, %v581
    %v583 = vpop.f32.mrb[0].mxu0
    %584 = vdwg.mxu0
    %v585 = vld [vmem:[%s12] sm:$0xff]
    %586 = vmatprep.subr.mxu0 0.0
    %587 = vmatpush1.msra.mxu0 %v585
    %588 = vmatprep.subr.mxu0 0.0
    %589 = vmatpush1.msra.mxu0 0.0
    %590 = vmatprep.subr.mxu0 0.0
    %591 = vmatpush1.msra.mxu0 0.0
    %592 = vmatprep.subr.mxu0 0.0
    %593 = vmatpush1.msra.mxu0 0.0
    %594 = vmatprep.subr.mxu0 0.0
    %595 = vmatpush1.msra.mxu0 0.0
    %596 = vmatprep.subr.mxu0 0.0
    %597 = vmatpush1.msra.mxu0 0.0
    %598 = vmatprep.subr.mxu0 0.0
    %599 = vmatpush1.msra.mxu0 0.0
    %600 = vmatprep.subr.mxu0 0.0
    %601 = vmatpush1.msra.mxu0 0.0
    %602 = vmatprep.subr.mxu0 0.0
    %603 = vmatpush1.msra.mxu0 0.0
    %604 = vmatprep.subr.mxu0 0.0
    %605 = vmatpush1.msra.mxu0 0.0
    %606 = vmatprep.subr.mxu0 0.0
    %607 = vmatpush1.msra.mxu0 0.0
    %608 = vmatprep.subr.mxu0 0.0
    %609 = vmatpush1.msra.mxu0 0.0
    %610 = vmatprep.subr.mxu0 0.0
    %611 = vmatpush1.msra.mxu0 0.0
    %612 = vmatprep.subr.mxu0 0.0
    %613 = vmatpush1.msra.mxu0 0.0
    %614 = vmatprep.subr.mxu0 0.0
    %615 = vmatpush1.msra.mxu0 0.0
    %616 = vmatprep.subr.mxu0 0.0
    %617 = vmatpush1.msra.mxu0 0.0
    %618 = vmatprep.subr.mxu0 0.0
    %619 = vmatpush1.msra.mxu0 0.0
    %620 = vmatprep.subr.mxu0 0.0
    %621 = vmatpush1.msra.mxu0 0.0
    %622 = vmatprep.subr.mxu0 0.0
    %623 = vmatpush1.msra.mxu0 0.0
    %624 = vmatprep.subr.mxu0 0.0
    %625 = vmatpush1.msra.mxu0 0.0
    %626 = vmatprep.subr.mxu0 0.0
    %627 = vmatpush1.msra.mxu0 0.0
    %628 = vmatprep.subr.mxu0 0.0
    %629 = vmatpush1.msra.mxu0 0.0
    %630 = vmatprep.subr.mxu0 0.0
    %631 = vmatpush1.msra.mxu0 0.0
    %632 = vmatprep.subr.mxu0 0.0
    %633 = vmatpush1.msra.mxu0 0.0
    %634 = vmatprep.subr.mxu0 0.0
    %635 = vmatpush1.msra.mxu0 0.0
    %636 = vmatprep.subr.mxu0 0.0
    %637 = vmatpush1.msra.mxu0 0.0
    %638 = vmatprep.subr.mxu0 0.0
    %639 = vmatpush1.msra.mxu0 0.0
    %640 = vmatprep.subr.mxu0 0.0
    %641 = vmatpush1.msra.mxu0 0.0
    %642 = vmatprep.subr.mxu0 0.0
    %643 = vmatpush1.msra.mxu0 0.0
    %644 = vmatprep.subr.mxu0 0.0
    %645 = vmatpush1.msra.mxu0 0.0
    %646 = vmatprep.subr.mxu0 0.0
    %647 = vmatpush1.msra.mxu0 0.0
    %648 = vmatprep.subr.mxu0 0.0
    %649 = vmatpush1.msra.mxu0 0.0
    %650 = vmatprep.mubr.f32.mxu0 0.0
    %651 = vmatmul.mubr.f32.gmra.mrb[0].mxu0 %v236
    %v652 = vpop.f32.mrb[0].mxu0
    %v653 = vadd.f32 0.0, %v652
    %v654 = vpop.f32.mrb[0].mxu0
    %655 = vdwg.mxu0
    %v656 = vadd.f32 %v582, %v653
    %v657 = vld [vmem:[%s13] sm:$0xff]
    %658 = vmatprep.subr.mxu0 0.0
    %659 = vmatpush1.msra.mxu0 %v657
    %660 = vmatprep.subr.mxu0 0.0
    %661 = vmatpush1.msra.mxu0 0.0
    %662 = vmatprep.subr.mxu0 0.0
    %663 = vmatpush1.msra.mxu0 0.0
    %664 = vmatprep.subr.mxu0 0.0
    %665 = vmatpush1.msra.mxu0 0.0
    %666 = vmatprep.subr.mxu0 0.0
    %667 = vmatpush1.msra.mxu0 0.0
    %668 = vmatprep.subr.mxu0 0.0
    %669 = vmatpush1.msra.mxu0 0.0
    %670 = vmatprep.subr.mxu0 0.0
    %671 = vmatpush1.msra.mxu0 0.0
    %672 = vmatprep.subr.mxu0 0.0
    %673 = vmatpush1.msra.mxu0 0.0
    %674 = vmatprep.subr.mxu0 0.0
    %675 = vmatpush1.msra.mxu0 0.0
    %676 = vmatprep.subr.mxu0 0.0
    %677 = vmatpush1.msra.mxu0 0.0
    %678 = vmatprep.subr.mxu0 0.0
    %679 = vmatpush1.msra.mxu0 0.0
    %680 = vmatprep.subr.mxu0 0.0
    %681 = vmatpush1.msra.mxu0 0.0
    %682 = vmatprep.subr.mxu0 0.0
    %683 = vmatpush1.msra.mxu0 0.0
    %684 = vmatprep.subr.mxu0 0.0
    %685 = vmatpush1.msra.mxu0 0.0
    %686 = vmatprep.subr.mxu0 0.0
    %687 = vmatpush1.msra.mxu0 0.0
    %688 = vmatprep.subr.mxu0 0.0
    %689 = vmatpush1.msra.mxu0 0.0
    %690 = vmatprep.subr.mxu0 0.0
    %691 = vmatpush1.msra.mxu0 0.0
    %692 = vmatprep.subr.mxu0 0.0
    %693 = vmatpush1.msra.mxu0 0.0
    %694 = vmatprep.subr.mxu0 0.0
    %695 = vmatpush1.msra.mxu0 0.0
    %696 = vmatprep.subr.mxu0 0.0
    %697 = vmatpush1.msra.mxu0 0.0
    %698 = vmatprep.subr.mxu0 0.0
    %699 = vmatpush1.msra.mxu0 0.0
    %700 = vmatprep.subr.mxu0 0.0
    %701 = vmatpush1.msra.mxu0 0.0
    %702 = vmatprep.subr.mxu0 0.0
    %703 = vmatpush1.msra.mxu0 0.0
    %704 = vmatprep.subr.mxu0 0.0
    %705 = vmatpush1.msra.mxu0 0.0
    %706 = vmatprep.subr.mxu0 0.0
    %707 = vmatpush1.msra.mxu0 0.0
    %708 = vmatprep.subr.mxu0 0.0
    %709 = vmatpush1.msra.mxu0 0.0
    %710 = vmatprep.subr.mxu0 0.0
    %711 = vmatpush1.msra.mxu0 0.0
    %712 = vmatprep.subr.mxu0 0.0
    %713 = vmatpush1.msra.mxu0 0.0
    %714 = vmatprep.subr.mxu0 0.0
    %715 = vmatpush1.msra.mxu0 0.0
    %716 = vmatprep.subr.mxu0 0.0
    %717 = vmatpush1.msra.mxu0 0.0
    %718 = vmatprep.subr.mxu0 0.0
    %719 = vmatpush1.msra.mxu0 0.0
    %720 = vmatprep.subr.mxu0 0.0
    %721 = vmatpush1.msra.mxu0 0.0
    %722 = vmatprep.mubr.f32.mxu0 0.0
    %723 = vmatmul.mubr.f32.gmra.mrb[0].mxu0 %v428
    %v724 = vpop.f32.mrb[0].mxu0
    %v725 = vadd.f32 0.0, %v724
    %v726 = vpop.f32.mrb[0].mxu0
    %727 = vdwg.mxu0
    %v728 = vadd.f32 %v656, %v725
    %v729 = vcvt.s32.f32 %v340
    %v730 = vld [vmem:[%s14] sm:$0x1]
    %v732 = vlaneseq
    %v733 = vshrl.u32 %v732, 7
    %v734 = vsub.s32 0, %v733
    %v735 = vrot.slane %v730, %v734
    %v737 = vmul.f32 %v729, %v735
    %v738 = vadd.f32 %v728, %v737
    %739 = vst [vmem:[#allocation2] sm:$0xff] %v738
    // Predicated region
    $region62: #{tpu_custom_call.1} parent=1 // pred_check
      _
    $region63: #{tpu_custom_call.1} parent=1 // pred_check_branch
      %741 = sbr.rel (0) target = $region65
    $region64: #{tpu_custom_call.1} parent=1 // pred_region
      %s743 = ssub.s32 128, 128
      %744 = vsyncadd [#allocation3], %s743
      %s746 = sshll.u32 [#allocation2], 4
      %s747 = int_to_ptr.vmem [resolvable:$true] %s746
      %749 = dma.vmem_to_hbm [thread:$0]  %s747, 128, %s15, [#allocation3]
    $region65: #{tpu_custom_call.1} parent=1 // pred_fallthru
      _
    // Predicated region
    $region66: #{tpu_custom_call.1} parent=1 // pred_check
      _
    $region67: #{tpu_custom_call.1} parent=1 // pred_check_branch
      %751 = sbr.rel (0) target = $region69
    $region68: #{tpu_custom_call.1} parent=1 // pred_region
      %752 = dma.done [#allocation3], 128
    $region69: #{tpu_custom_call.1} parent=1 // pred_fallthru
      _
    %753 = vsyncpa [#allocation3], 1

</llo_original>
